<compile_context>
chip_gen: v5e
topology: v5e:2x2
jax: 0.10.0
libtpu: 0.0.40
codegen_flags: <defaults>
</compile_context>

<pallas_src>
import math

import jax
import jax.numpy as jnp
import numpy as np
from jax.experimental import pallas as pl
from jax.experimental.pallas import tpu as pltpu


def _round_up(x, m):
    return ((x + m - 1) // m) * m


def _inverse_affine_matrix(angle, translate, scale, shear, center=(0.0, 0.0)):
    """Port of torchvision _get_inverse_affine_matrix (maps output->input coords)."""
    rot = math.radians(angle)
    sx = math.radians(shear[0])
    sy = math.radians(shear[1])
    cx, cy = center
    tx, ty = translate

    a = math.cos(rot - sy) / math.cos(sy)
    b = -math.cos(rot - sy) * math.tan(sx) / math.cos(sy) - math.sin(rot)
    c = math.sin(rot - sy) / math.cos(sy)
    d = -math.sin(rot - sy) * math.tan(sx) / math.cos(sy) + math.cos(rot)

    m = [d, -b, 0.0, -c, a, 0.0]
    m = [v / scale for v in m]
    m[2] += m[0] * (-cx - tx) + m[1] * (-cy - ty)
    m[5] += m[3] * (-cx - tx) + m[4] * (-cy - ty)
    m[2] += cx
    m[5] += cy
    return m  # [m00, m01, m02, m10, m11, m12]


def _source_indices(H, W, matrix, hflip):
    """Flat input-pixel index per output pixel (row-major), -1 where fill=0 applies.

    Program-invariant: depends only on (H, W) and the affine scalars, so it is
    computed once on the host (f32 math, round-half-to-even == reference).
    """
    m = [np.float32(v) for v in matrix]
    half_x = np.float32((W - 1) / 2.0)
    half_y = np.float32((H - 1) / 2.0)
    j_out = np.arange(W, dtype=np.float32)[None, :]   # (1, W)
    i_out = np.arange(H, dtype=np.float32)[:, None]   # (H, 1)
    x_out = j_out - half_x
    y_out = i_out - half_y
    src_x = m[0] * x_out + m[1] * y_out + m[2] + half_x
    src_y = m[3] * x_out + m[4] * y_out + m[5] + half_y
    jx = np.round(src_x).astype(np.int64)
    iy = np.round(src_y).astype(np.int64)
    valid = (jx >= 0) & (jx < W) & (iy >= 0) & (iy < H)
    if hflip:
        # hflip of the *input* image == flip the gathered column index
        jx = (W - 1) - jx
    flat = iy * W + jx
    # -1 never matches an input-pixel iota -> the one-hot column is all zeros
    # -> output 0 (the fill value).  Also prevents OOB aliasing (e.g. jx=-1).
    flat = np.where(valid, flat, -1).astype(np.int32)
    return flat.reshape(-1)                            # (H*W,)


def _make_gather_matmul_kernel(tk, tn):
    def kernel(src_ref, img_ref, out_ref, acc_ref):
        # src_ref: (1, tn)  int32  -- input pixel index per output pixel (-1 => 0)
        # img_ref: (TM, tk)        -- image rows x input-pixel tile, native dtype
        # out_ref: (TM, tn)
        # acc_ref: (TM, tn) f32    -- accumulator over the K (input-pixel) axis
        k = pl.program_id(2)
        q_in = jax.lax.broadcasted_iota(jnp.int32, (tk, tn), 0) + k * tk
        # One nonzero per column -> exact in the image dtype (no f32 upcast).
        onehot = (q_in == src_ref[...]).astype(img_ref.dtype)
        prod = jnp.dot(img_ref[...], onehot, preferred_element_type=jnp.float32)

        @pl.when(k == 0)
        def _():
            acc_ref[...] = prod

        @pl.when(k != 0)
        def _():
            acc_ref[...] += prod

        @pl.when(k == pl.num_programs(2) - 1)
        def _():
            out_ref[...] = acc_ref[...].astype(out_ref.dtype)

    return kernel


def random_affine_forward(x, angle, translate, scale, shear, flip):
    """x: (N, C, H, W).  Returns same shape/dtype."""
    N, C, H, W = x.shape
    NC, HW = N * C, H * W

    matrix = _inverse_affine_matrix(angle, translate, scale, shear)
    # flip[1] (vflip) intentionally ignored: the reference forward discards it.
    flat_src = _source_indices(H, W, matrix, bool(flip[0]))

    # ---- tiling --------------------------------------------------------------
    # Row (sublane) axis: pad to 8, tile up to 128 (MXU height).
    if NC >= 128:
        NC_pad, TM = _round_up(NC, 128), 128
    else:
        NC_pad = _round_up(NC, 8)
        TM = NC_pad

    # Output-pixel (lane) axis: TN a multiple of 128 -> dense vst stores.
    TN = min(512, _round_up(HW, 128))
    # At tiny shapes, give the megacore two column tiles to split.
    if NC_pad // TM == 1 and _round_up(HW, TN) // TN == 1 and TN % 256 == 0:
        TN //= 2
    HW_out_pad = _round_up(HW, TN)

    # Input-pixel (K / reduction) axis: cap the per-step image tile in VMEM.
    TK = min(2048, _round_up(HW, 128))
    HW_in_pad = _round_up(HW, TK)

    img2d = x.reshape(NC, HW)
    if NC_pad != NC or HW_in_pad != HW:
        img2d = jnp.pad(img2d, ((0, NC_pad - NC), (0, HW_in_pad - HW)))

    src = np.full((1, HW_out_pad), -1, dtype=np.int32)  # padded output pixels -> 0
    src[0, :HW] = flat_src
    src = jnp.asarray(src)

    grid = (NC_pad // TM, HW_out_pad // TN, HW_in_pad // TK)
    out2d = pl.pallas_call(
        _make_gather_matmul_kernel(TK, TN),
        out_shape=jax.ShapeDtypeStruct((NC_pad, HW_out_pad), x.dtype),
        grid_spec=pltpu.PrefetchScalarGridSpec(
            num_scalar_prefetch=0,
            grid=grid,
            in_specs=[
                pl.BlockSpec((1, TN), lambda r, c, k: (0, c)),   # gather indices
                pl.BlockSpec((TM, TK), lambda r, c, k: (r, k)),  # image tile
            ],
            out_specs=pl.BlockSpec((TM, TN), lambda r, c, k: (r, c)),
            scratch_shapes=[pltpu.VMEM((TM, TN), jnp.float32)],
        ),
        compiler_params=pltpu.CompilerParams(
            dimension_semantics=("parallel", "parallel", "arbitrary"),
        ),
    )(src, img2d)

    return out2d[:NC, :HW].reshape(N, C, H, W)


def _ref_forward(x_np, angle, translate, scale, shear, flip):
    """Pure-numpy reference (same math as torchvision tensor affine, nearest, fill=0)."""
    N, C, H, W = x_np.shape
    img = x_np[..., ::-1] if flip[0] else x_np  # hflip; vflip discarded by the module
    m = _inverse_affine_matrix(angle, translate, scale, shear)
    out = np.zeros_like(x_np)
    half_x, half_y = (W - 1) / 2.0, (H - 1) / 2.0
    for i in range(H):
        for j in range(W):
            xo, yo = j - half_x, i - half_y
            sx = np.float32(m[0]) * np.float32(xo) + np.float32(m[1]) * np.float32(yo) \
                 + np.float32(m[2]) + np.float32(half_x)
            sy = np.float32(m[3]) * np.float32(xo) + np.float32(m[4]) * np.float32(yo) \
                 + np.float32(m[5]) + np.float32(half_y)
            jx, iy = int(np.round(sx)), int(np.round(sy))
            if 0 <= jx < W and 0 <= iy < H:
                out[:, :, i, j] = img[:, :, iy, jx]
    return out


if __name__ == "__main__":
    key = jax.random.PRNGKey(0)
    N, C, H, W = 2, 4, 16, 16
    x = jax.random.normal(key, (N, C, H, W), dtype=jnp.float32)

    # Deterministic "randomize()" draw (values within the module's configured ranges).
    angle = 10.0                      # degrees, in (-180, 180)
    translate = (0.25, -0.3)          # in (-0.5, 0.5)  (module passes these directly)
    scale = 1.05                      # in (0.9, 1.1)
    shear = (0.95, 1.05)              # module bug: shear sampled from scale range
    flip = (True, True)               # hflip applied; vflip discarded by the module

    y = random_affine_forward(x, angle, translate, scale, shear, flip)
    y = jax.block_until_ready(y)

    y_ref = _ref_forward(np.asarray(x), angle, translate, scale, shear, flip)
    np.testing.assert_allclose(np.asarray(y), y_ref, rtol=1e-5, atol=1e-5)

    print("KERNEL_OK")
</pallas_src>

<mosaic_0001>
module attributes {stable_mosaic.version = 11 : i64} {
  func.func @kernel(%arg0: i32, %arg1: i32, %arg2: i32, %arg3: memref<1x128xi32, #tpu.memory_space<vmem>>, %arg4: memref<8x256xf32, #tpu.memory_space<vmem>>, %arg5: memref<8x128xf32, #tpu.memory_space<vmem>>, %arg6: memref<8x128xf32, #tpu.memory_space<vmem>>) attributes {dimension_semantics = [#tpu.dimension_semantics<parallel>, #tpu.dimension_semantics<parallel>, #tpu.dimension_semantics<arbitrary>], iteration_bounds = array<i64: 1, 2, 1>, scalar_prefetch = 0 : i64, scratch_operands = 1 : i64, tpu.core_type = #tpu.core_type<tc>, window_params = [{transform_indices = @transform_0, window_bounds = array<i64: 1, 128>}, {transform_indices = @transform_1, window_bounds = array<i64: 8, 256>}, {transform_indices = @transform_2, window_bounds = array<i64: 8, 128>}]} {
    %0 = tpu.iota {dimensions = array<i32: 0>} : vector<256x128xi32>
    %c256_i32 = arith.constant 256 : i32
    %1 = arith.muli %arg2, %c256_i32 : i32
    %2 = vector.broadcast %1 : i32 to vector<256x128xi32>
    %3 = arith.addi %0, %2 : vector<256x128xi32>
    %c0 = arith.constant 0 : index
    %c0_0 = arith.constant 0 : index
    %4 = vector.load %arg3[%c0, %c0_0] : memref<1x128xi32, #tpu.memory_space<vmem>>, vector<1x128xi32>
    %5 = vector.broadcast %4 : vector<1x128xi32> to vector<256x128xi32>
    %6 = arith.cmpi eq, %3, %5 : vector<256x128xi32>
    %7 = arith.extui %6 : vector<256x128xi1> to vector<256x128xi32>
    %8 = arith.sitofp %7 : vector<256x128xi32> to vector<256x128xf32>
    %c0_1 = arith.constant 0 : index
    %c0_2 = arith.constant 0 : index
    %9 = vector.load %arg4[%c0_1, %c0_2] : memref<8x256xf32, #tpu.memory_space<vmem>>, vector<8x256xf32>
    %cst = arith.constant dense<0.000000e+00> : vector<8x128xf32>
    %10 = tpu.matmul %9, %8, %cst {dimension_numbers = #tpu.dot_dimension_numbers<[1], [0], [0], [1], [0, 0, 1, 1], [], []>} : vector<8x256xf32>, vector<256x128xf32>, vector<8x128xf32> -> vector<8x128xf32>
    %c0_i32 = arith.constant 0 : i32
    %11 = arith.cmpi eq, %arg2, %c0_i32 : i32
    %12 = arith.extui %11 : i1 to i32
    %c0_i32_3 = arith.constant 0 : i32
    %13 = arith.cmpi ne, %12, %c0_i32_3 : i32
    scf.if %13 {
      %c0_8 = arith.constant 0 : index
      %c0_9 = arith.constant 0 : index
      %20 = vector.load %arg6[%c0_8, %c0_9] : memref<8x128xf32, #tpu.memory_space<vmem>>, vector<8x128xf32>
      tpu.vector_store %arg6[%c0_8, %c0_9], %10 {strides = array<i32>} : memref<8x128xf32, #tpu.memory_space<vmem>>, vector<8x128xf32>,
    } else {
    }
    %c0_i32_4 = arith.constant 0 : i32
    %14 = arith.cmpi ne, %arg2, %c0_i32_4 : i32
    %15 = arith.extui %14 : i1 to i32
    %c0_i32_5 = arith.constant 0 : i32
    %16 = arith.cmpi ne, %15, %c0_i32_5 : i32
    scf.if %16 {
      %c0_8 = arith.constant 0 : index
      %c0_9 = arith.constant 0 : index
      %20 = vector.load %arg6[%c0_8, %c0_9] : memref<8x128xf32, #tpu.memory_space<vmem>>, vector<8x128xf32>
      %21 = arith.addf %20, %10 : vector<8x128xf32>
      %c0_10 = arith.constant 0 : index
      %c0_11 = arith.constant 0 : index
      %22 = vector.load %arg6[%c0_10, %c0_11] : memref<8x128xf32, #tpu.memory_space<vmem>>, vector<8x128xf32>
      tpu.vector_store %arg6[%c0_10, %c0_11], %21 {strides = array<i32>} : memref<8x128xf32, #tpu.memory_space<vmem>>, vector<8x128xf32>,
    } else {
    }
    %c0_i32_6 = arith.constant 0 : i32
    %17 = arith.cmpi eq, %arg2, %c0_i32_6 : i32
    %18 = arith.extui %17 : i1 to i32
    %c0_i32_7 = arith.constant 0 : i32
    %19 = arith.cmpi ne, %18, %c0_i32_7 : i32
    scf.if %19 {
      %c0_8 = arith.constant 0 : index
      %c0_9 = arith.constant 0 : index
      %20 = vector.load %arg6[%c0_8, %c0_9] : memref<8x128xf32, #tpu.memory_space<vmem>>, vector<8x128xf32>
      %c0_10 = arith.constant 0 : index
      %c0_11 = arith.constant 0 : index
      %21 = vector.load %arg5[%c0_10, %c0_11] : memref<8x128xf32, #tpu.memory_space<vmem>>, vector<8x128xf32>
      tpu.vector_store %arg5[%c0_10, %c0_11], %20 {strides = array<i32>} : memref<8x128xf32, #tpu.memory_space<vmem>>, vector<8x128xf32>,
    } else {
    }
    return
  }
  func.func @transform_0(%arg0: i32, %arg1: i32, %arg2: i32) -> (i32, i32) {
    %c0_i32 = arith.constant 0 : i32
    %c0_i32_0 = arith.constant 0 : i32
    return %c0_i32, %arg1 : i32, i32
  }
  func.func @transform_1(%arg0: i32, %arg1: i32, %arg2: i32) -> (i32, i32) {
    %c0_i32 = arith.constant 0 : i32
    return %arg0, %arg2 : i32, i32
  }
  func.func @transform_2(%arg0: i32, %arg1: i32, %arg2: i32) -> (i32, i32) {
    %c0_i32 = arith.constant 0 : i32
    return %arg0, %arg1 : i32, i32
  }
}

</mosaic_0001>

<llo_original>
// kernel: tpu_custom_call.1
$region0: #{tpu_custom_call.1}
  #allocation0 [shape = 'u32[]', space=smem, size = 0x4, offset = 0x4, fixed_abs, tag = 'smem constant byte address 0x4 - core index']
  #allocation1 [shape = 'u32[72,128]{1,0:T(1,128)}', space=vmem, size = 0x9000, scoped, tag = 'internal scratch']
  #allocation2 [shape = 'f32[8,128]{1,0:T(8,128)}', space=vmem, size = 0x1000, scoped, tag = 'scratch operand']
  %s0 = inlined_call_operand.hbm [shape: s32[1,256], index: 0, kind: input, shape index: {}]
  %s1 = inlined_call_operand.hbm [shape: f32[8,256], index: 1, kind: input, shape index: {}]
  %s2 = inlined_call_operand.hbm [shape: f32[8,256], index: 2, kind: output, shape index: {}]
  %s3 = sld [smem:[#allocation0]]
  $region61: #{tpu_custom_call.1} parent=0
    _
  %s5 = ssub.s32 1, %s3
  %s6 = scalar_select 0, %s5, %s3
  $region1: #{tpu_custom_call.1} parent=0
    #allocation3 [shape = 'u8[1024]{0}', space=vmem, size = 0x400, scoped, tag = 'input window, operand 0']
    #allocation4 [shape = 's32[2]{0}', space=sflag, size = 0x8, scoped, tag = 'scoped memory for tpu_custom_call.1']
    #allocation5 [shape = 's32[2]{0}', space=sflag, size = 0x8, scoped, tag = 'scoped memory for tpu_custom_call.1']
    #allocation6 [shape = 'u8[8192]{0}', space=vmem, size = 0x2000, scoped, tag = 'input window, operand 1, single buffered']
    #allocation7 [shape = 's32[1]{0}', space=sflag, size = 0x4, scoped, tag = 'scoped memory for tpu_custom_call.1']
    #allocation8 [shape = 'u8[8192]{0}', space=vmem, size = 0x2000, scoped, tag = 'output window, operand 0']
    %7 = vsyncpa [#allocation4], 0
    %s8 = scalar_lea.sflag [#allocation4], 1
    %9 = vsyncpa %s8, 0
    %10 = vsyncpa [#allocation7], 0
    %11 = vsyncpa [#allocation5], 0
    %s12 = scalar_lea.sflag [#allocation5], 1
    %13 = vsyncpa %s12, 0
    loop: start=0, step=1, limit=4
    $region2: #{tpu_custom_call.1} parent=1 // loop_pre_header
      _
    $region3: #{tpu_custom_call.1} parent=1 // loop_header
      %s15 = sphi 0, %s19
      %p16 = scmp.ge.s32.totalorder %s15, 4
      %s22 = sphi 0, %s41
      %s23 = sphi 0, %s37
      %s24 = sphi 0, %s33
      %s25 = sphi 0, %s22
      %s26 = sphi 0, %s23
      %s27 = sphi 0, %s24
      %s28 = sphi 0, %s25
      %s29 = sphi 0, %s26
      %s30 = sphi 0, %s27
      %s44 = sphi 0, %s46
      %s47 = sphi 0, %s44
      %s48 = sphi 0, %s47
      %s64 = sphi 0, %s48
      %s72 = sphi 0, %s74
      %s75 = sphi 0, %s72
      %s76 = sphi 0, %s75
      %s92 = sphi 0, %s76
      %s100 = sphi 0, %s102
      %s103 = sphi 0, %s100
      %s104 = sphi 0, %s103
      %s120 = sphi 0, %s104
    $region4: #{tpu_custom_call.1} parent=1 // loop_header_branch
      %18 = sbr.rel (%p16) target = $region8
    $region5: #{tpu_custom_call.1} parent=1 // loop_body
      %s20 = ssub.s32 %s15, 1
      %s21 = ssub.s32 %s15, 2
      %s31 = sadd.s32 1, %s24
      %p32 = scmp.ge.s32.totalorder %s31, 1
      %s33 = scalar_select %p32, 0, %s31
      %s34 = sadd.s32 1, %s23
      %s35 = scalar_select %p32, %s34, %s23
      %p36 = scmp.ge.s32.totalorder %s35, 2
      %s37 = scalar_select %p36, 0, %s35
      %s38 = sadd.s32 1, %s22
      %s39 = scalar_select %p36, %s38, %s22
      %p40 = scmp.ge.s32.totalorder %s39, 1
      %s41 = scalar_select %p40, 0, %s39
      %s42 = ssub.s32 %s23, %s37
      %p43 = scmp.eq.s32.totalorder %s42, 0
      %s45 = sadd.s32 %s44, 1
      %s46 = scalar_select %p43, %s44, %s45
      %p49 = pneg %p43
      %p50 = scmp.eq.s32.totalorder %s15, 1
      %p51 = por %p49, %p50
      %p52 = scmp.ne.s32.totalorder %s44, %s47
      %p53 = scmp.eq.s32.totalorder %s15, 0
      %p54 = por %p52, %p53
      %p55 = scmp.ne.s32.totalorder %s44, %s47
      %p56 = scmp.eq.s32.totalorder %s20, 1
      %p57 = por %p55, %p56
      %p58 = scmp.ne.s32.totalorder %s47, %s48
      %p59 = scmp.eq.s32.totalorder %s20, 0
      %p60 = por %p58, %p59
      %p61 = scmp.ne.s32.totalorder %s47, %s48
      %p62 = scmp.eq.s32.totalorder %s21, 1
      %p63 = por %p61, %p62
      %p65 = scmp.ne.s32.totalorder %s48, %s64
      %p66 = scmp.eq.s32.totalorder %s21, 0
      %p67 = por %p65, %p66
      %s68 = ssub.s32 %s22, %s41
      %s69 = ssub.s32 %s24, %s33
      %s70 = sor.u32 %s68, %s69
      %p71 = scmp.eq.s32.totalorder %s70, 0
      %s73 = sadd.s32 %s72, 1
      %s74 = scalar_select %p71, %s72, %s73
      %p77 = pneg %p71
      %p78 = scmp.eq.s32.totalorder %s15, 1
      %p79 = por %p77, %p78
      %p80 = scmp.ne.s32.totalorder %s72, %s75
      %p81 = scmp.eq.s32.totalorder %s15, 0
      %p82 = por %p80, %p81
      %p83 = scmp.ne.s32.totalorder %s72, %s75
      %p84 = scmp.eq.s32.totalorder %s20, 1
      %p85 = por %p83, %p84
      %p86 = scmp.ne.s32.totalorder %s75, %s76
      %p87 = scmp.eq.s32.totalorder %s20, 0
      %p88 = por %p86, %p87
      %p89 = scmp.ne.s32.totalorder %s75, %s76
      %p90 = scmp.eq.s32.totalorder %s21, 1
      %p91 = por %p89, %p90
      %p93 = scmp.ne.s32.totalorder %s76, %s92
      %p94 = scmp.eq.s32.totalorder %s21, 0
      %p95 = por %p93, %p94
      %s96 = ssub.s32 %s22, %s41
      %s97 = ssub.s32 %s23, %s37
      %s98 = sor.u32 %s96, %s97
      %p99 = scmp.eq.s32.totalorder %s98, 0
      %s101 = sadd.s32 %s100, 1
      %s102 = scalar_select %p99, %s100, %s101
      %p105 = pneg %p99
      %p106 = scmp.eq.s32.totalorder %s15, 1
      %p107 = por %p105, %p106
      %p108 = scmp.ne.s32.totalorder %s100, %s103
      %p109 = scmp.eq.s32.totalorder %s15, 0
      %p110 = por %p108, %p109
      %p111 = scmp.ne.s32.totalorder %s100, %s103
      %p112 = scmp.eq.s32.totalorder %s20, 1
      %p113 = por %p111, %p112
      %p114 = scmp.ne.s32.totalorder %s103, %s104
      %p115 = scmp.eq.s32.totalorder %s20, 0
      %p116 = por %p114, %p115
      %p117 = scmp.ne.s32.totalorder %s103, %s104
      %p118 = scmp.eq.s32.totalorder %s21, 1
      %p119 = por %p117, %p118
      %p121 = scmp.ne.s32.totalorder %s104, %s120
      %p122 = scmp.eq.s32.totalorder %s21, 0
      %p123 = por %p121, %p122
      %p124 = scmp.le.s32.totalorder 1, %s15
      %p125 = scmp.lt.s32.totalorder %s15, 3
      %p126 = pnand %p124, %p125
      %p127 = pneg %p126
      // Predicated region
      $region9: #{tpu_custom_call.1} parent=5 // pred_check
        _
      $region10: #{tpu_custom_call.1} parent=5 // pred_check_branch
        %129 = sbr.rel (%p126) target = $region12
      $region11: #{tpu_custom_call.1} parent=5 // pred_region
        %s130 = ssub.s32 %s15, 1
        // Predicated region
        $region13: #{tpu_custom_call.1} parent=11 // pred_check
          %p131 = pneg %p88
        $region14: #{tpu_custom_call.1} parent=11 // pred_check_branch
          %133 = sbr.rel (%p131) target = $region16
        $region15: #{tpu_custom_call.1} parent=11 // pred_region
          %s134 = smul.u32 2, %s27
          %136 = vsyncadd [#allocation7], 0
          %s137 = smul.addr %s25, 2
          %s138 = sadd.s32 %s134, %s137
          %s139 = smul.addr %s138, 8
          %s140 = scalar_lea.hbm %s1, %s139
          %s142 = sshll.u32 %s140, 4
          %s143 = int_to_ptr.hbm [resolvable:$true] %s142
          %s144 = sshll.u32 [#allocation6], 4
          %s145 = int_to_ptr.vmem [resolvable:$true] %s144
          %147 = dma.hbm_to_vmem [thread:$0]  %s143, 256, %s145, [#allocation7]
        $region16: #{tpu_custom_call.1} parent=11 // pred_fallthru
          _
      $region12: #{tpu_custom_call.1} parent=5 // pred_fallthru
        _
      %p148 = scmp.lt.s32.totalorder %s15, 2
      // Predicated region
      $region17: #{tpu_custom_call.1} parent=5 // pred_check
        %p149 = pneg %p148
      $region18: #{tpu_custom_call.1} parent=5 // pred_check_branch
        %151 = sbr.rel (%p149) target = $region20
      $region19: #{tpu_custom_call.1} parent=5 // pred_region
        // Predicated region
        $region21: #{tpu_custom_call.1} parent=19 // pred_check
          %p152 = pneg %p54
        $region22: #{tpu_custom_call.1} parent=19 // pred_check_branch
          %154 = sbr.rel (%p152) target = $region24
        $region23: #{tpu_custom_call.1} parent=19 // pred_region
          %s155 = sand.u32 %s44, 1
          %s156 = scalar_lea.sflag [#allocation4], %s155
          %s157 = sand.u32 %s44, 1
          %s158 = scalar_lea.vmem [#allocation3], %s157
          %160 = vsyncadd %s156, 0
          %s161 = scalar_lea.hbm %s0, %s23
          %s163 = sshll.u32 %s161, 4
          %s164 = int_to_ptr.hbm [resolvable:$true] %s163
          %s165 = sshll.u32 %s158, 4
          %s166 = int_to_ptr.vmem [resolvable:$true] %s165
          %168 = dma.hbm_to_vmem [thread:$0]  %s164, 16, %s166, %s156
        $region24: #{tpu_custom_call.1} parent=19 // pred_fallthru
          _
      $region20: #{tpu_custom_call.1} parent=5 // pred_fallthru
        _
      %p169 = scmp.le.s32.totalorder 1, %s15
      %p170 = scmp.lt.s32.totalorder %s15, 3
      %p171 = pnand %p169, %p170
      %p172 = pneg %p171
      // Predicated region
      $region25: #{tpu_custom_call.1} parent=5 // pred_check
        _
      $region26: #{tpu_custom_call.1} parent=5 // pred_check_branch
        %174 = sbr.rel (%p171) target = $region28
      $region27: #{tpu_custom_call.1} parent=5 // pred_region
        %s175 = ssub.s32 %s15, 1
        %s176 = sand.u32 %s47, 1
        %s177 = scalar_lea.sflag [#allocation4], %s176
        %s178 = sand.u32 %s47, 1
        %s179 = scalar_lea.vmem [#allocation3], %s178
        // Predicated region
        $region29: #{tpu_custom_call.1} parent=27 // pred_check
          %p180 = pneg %p60
        $region30: #{tpu_custom_call.1} parent=27 // pred_check_branch
          %182 = sbr.rel (%p180) target = $region32
        $region31: #{tpu_custom_call.1} parent=27 // pred_region
          %184 = dma.done %s177, 16
        $region32: #{tpu_custom_call.1} parent=27 // pred_fallthru
          _
        // Predicated region
        $region33: #{tpu_custom_call.1} parent=27 // pred_check
          %p185 = pneg %p88
        $region34: #{tpu_custom_call.1} parent=27 // pred_check_branch
          %187 = sbr.rel (%p185) target = $region36
        $region35: #{tpu_custom_call.1} parent=27 // pred_region
          %189 = dma.done [#allocation7], 256
        $region36: #{tpu_custom_call.1} parent=27 // pred_fallthru
          _
        %s190 = sand.u32 %s47, 1
        %s191 = scalar_lea.sflag [#allocation4], %s190
        %s192 = sand.u32 %s47, 1
        %s193 = scalar_lea.vmem [#allocation3], %s192
        %p194 = pneg %p60
        %p195 = pneg %p57
        %p196 = pneg %p88
        %p197 = pneg %p85
        %p198 = pneg %p116
        %p199 = pneg %p113
        %s200 = sand.u32 %s103, 1
        %s201 = scalar_lea.sflag [#allocation5], %s200
        %s202 = sand.u32 %s103, 1
        %s203 = smul.addr %s202, 8
        %s204 = scalar_lea.vmem [#allocation8], %s203
        %s205 = smul.u32 2, %s27
        %v206 = vlaneseq
        %v207 = vshrl.u32 %v206, 7
        %v208 = vadd.s32 %v207, 8
        %v209 = vadd.s32 %v207, 16
        %v210 = vadd.s32 %v207, 24
        %v211 = vadd.s32 %v207, 32
        %v212 = vadd.s32 %v207, 40
        %v213 = vadd.s32 %v207, 48
        %v214 = vadd.s32 %v207, 56
        %v215 = vadd.s32 %v207, 64
        %v216 = vadd.s32 %v207, 72
        %v217 = vadd.s32 %v207, 80
        %v218 = vadd.s32 %v207, 88
        %v219 = vadd.s32 %v207, 96
        %v220 = vadd.s32 %v207, 104
        %v221 = vadd.s32 %v207, 112
        %v222 = vadd.s32 %v207, 120
        %v223 = vadd.s32 %v207, 128
        %v224 = vadd.s32 %v207, 136
        %v225 = vadd.s32 %v207, 144
        %v226 = vadd.s32 %v207, 152
        %v227 = vadd.s32 %v207, 160
        %v228 = vadd.s32 %v207, 168
        %v229 = vadd.s32 %v207, 176
        %v230 = vadd.s32 %v207, 184
        %v231 = vadd.s32 %v207, 192
        %v232 = vadd.s32 %v207, 200
        %v233 = vadd.s32 %v207, 208
        %v234 = vadd.s32 %v207, 216
        %v235 = vadd.s32 %v207, 224
        %v236 = vadd.s32 %v207, 232
        %v237 = vadd.s32 %v207, 240
        %v238 = vadd.s32 %v207, 248
        %s239 = smul.u32 %s27, 256
        %v240 = vstv %s239
        %v241 = vadd.s32 %v207, %v240
        %v242 = vadd.s32 %v208, %v240
        %v243 = vadd.s32 %v209, %v240
        %v244 = vadd.s32 %v210, %v240
        %v245 = vadd.s32 %v211, %v240
        %v246 = vadd.s32 %v212, %v240
        %v247 = vadd.s32 %v213, %v240
        %v248 = vadd.s32 %v214, %v240
        %v249 = vadd.s32 %v215, %v240
        %v250 = vadd.s32 %v216, %v240
        %v251 = vadd.s32 %v217, %v240
        %v252 = vadd.s32 %v218, %v240
        %v253 = vadd.s32 %v219, %v240
        %v254 = vadd.s32 %v220, %v240
        %v255 = vadd.s32 %v221, %v240
        %v256 = vadd.s32 %v222, %v240
        %v257 = vadd.s32 %v223, %v240
        %v258 = vadd.s32 %v224, %v240
        %v259 = vadd.s32 %v225, %v240
        %v260 = vadd.s32 %v226, %v240
        %v261 = vadd.s32 %v227, %v240
        %v262 = vadd.s32 %v228, %v240
        %v263 = vadd.s32 %v229, %v240
        %v264 = vadd.s32 %v230, %v240
        %v265 = vadd.s32 %v231, %v240
        %v266 = vadd.s32 %v232, %v240
        %v267 = vadd.s32 %v233, %v240
        %v268 = vadd.s32 %v234, %v240
        %v269 = vadd.s32 %v235, %v240
        %v270 = vadd.s32 %v236, %v240
        %v271 = vadd.s32 %v237, %v240
        %v272 = vadd.s32 %v238, %v240
        %v273 = vld [vmem:[%s179] sm:$0x1]
        %v274 = vperm.slane %v273, 0
        %vm275 = vcmp.eq.s32.totalorder %v241, %v274
        %vm276 = vcmp.eq.s32.totalorder %v242, %v274
        %vm277 = vcmp.eq.s32.totalorder %v243, %v274
        %vm278 = vcmp.eq.s32.totalorder %v244, %v274
        %vm279 = vcmp.eq.s32.totalorder %v245, %v274
        %vm280 = vcmp.eq.s32.totalorder %v246, %v274
        %vm281 = vcmp.eq.s32.totalorder %v247, %v274
        %vm282 = vcmp.eq.s32.totalorder %v248, %v274
        %vm283 = vcmp.eq.s32.totalorder %v249, %v274
        %vm284 = vcmp.eq.s32.totalorder %v250, %v274
        %vm285 = vcmp.eq.s32.totalorder %v251, %v274
        %vm286 = vcmp.eq.s32.totalorder %v252, %v274
        %vm287 = vcmp.eq.s32.totalorder %v253, %v274
        %vm288 = vcmp.eq.s32.totalorder %v254, %v274
        %vm289 = vcmp.eq.s32.totalorder %v255, %v274
        %vm290 = vcmp.eq.s32.totalorder %v256, %v274
        %vm291 = vcmp.eq.s32.totalorder %v257, %v274
        %vm292 = vcmp.eq.s32.totalorder %v258, %v274
        %vm293 = vcmp.eq.s32.totalorder %v259, %v274
        %vm294 = vcmp.eq.s32.totalorder %v260, %v274
        %vm295 = vcmp.eq.s32.totalorder %v261, %v274
        %vm296 = vcmp.eq.s32.totalorder %v262, %v274
        %vm297 = vcmp.eq.s32.totalorder %v263, %v274
        %vm298 = vcmp.eq.s32.totalorder %v264, %v274
        %vm299 = vcmp.eq.s32.totalorder %v265, %v274
        %vm300 = vcmp.eq.s32.totalorder %v266, %v274
        %vm301 = vcmp.eq.s32.totalorder %v267, %v274
        %vm302 = vcmp.eq.s32.totalorder %v268, %v274
        %vm303 = vcmp.eq.s32.totalorder %v269, %v274
        %vm304 = vcmp.eq.s32.totalorder %v270, %v274
        %vm305 = vcmp.eq.s32.totalorder %v271, %v274
        %vm306 = vcmp.eq.s32.totalorder %v272, %v274
        %v307 = vsel %vm275, 1, 0
        %v308 = vsel %vm276, 1, 0
        %v309 = vsel %vm277, 1, 0
        %v310 = vsel %vm278, 1, 0
        %v311 = vsel %vm279, 1, 0
        %v312 = vsel %vm280, 1, 0
        %v313 = vsel %vm281, 1, 0
        %v314 = vsel %vm282, 1, 0
        %v315 = vsel %vm283, 1, 0
        %v316 = vsel %vm284, 1, 0
        %v317 = vsel %vm285, 1, 0
        %v318 = vsel %vm286, 1, 0
        %v319 = vsel %vm287, 1, 0
        %v320 = vsel %vm288, 1, 0
        %v321 = vsel %vm289, 1, 0
        %v322 = vsel %vm290, 1, 0
        %v323 = vsel %vm291, 1, 0
        %v324 = vsel %vm292, 1, 0
        %v325 = vsel %vm293, 1, 0
        %v326 = vsel %vm294, 1, 0
        %v327 = vsel %vm295, 1, 0
        %v328 = vsel %vm296, 1, 0
        %v329 = vsel %vm297, 1, 0
        %v330 = vsel %vm298, 1, 0
        %v331 = vsel %vm299, 1, 0
        %v332 = vsel %vm300, 1, 0
        %v333 = vsel %vm301, 1, 0
        %v334 = vsel %vm302, 1, 0
        %v335 = vsel %vm303, 1, 0
        %v336 = vsel %vm304, 1, 0
        %v337 = vsel %vm305, 1, 0
        %v338 = vsel %vm306, 1, 0
        %v339 = vcvt.s32.f32 %v307
        %v340 = vcvt.s32.f32 %v308
        %v341 = vcvt.s32.f32 %v309
        %v342 = vcvt.s32.f32 %v310
        %v343 = vcvt.s32.f32 %v311
        %v344 = vcvt.s32.f32 %v312
        %v345 = vcvt.s32.f32 %v313
        %v346 = vcvt.s32.f32 %v314
        %v347 = vcvt.s32.f32 %v315
        %v348 = vcvt.s32.f32 %v316
        %v349 = vcvt.s32.f32 %v317
        %v350 = vcvt.s32.f32 %v318
        %v351 = vcvt.s32.f32 %v319
        %v352 = vcvt.s32.f32 %v320
        %v353 = vcvt.s32.f32 %v321
        %v354 = vcvt.s32.f32 %v322
        %v355 = vcvt.s32.f32 %v323
        %v356 = vcvt.s32.f32 %v324
        %v357 = vcvt.s32.f32 %v325
        %v358 = vcvt.s32.f32 %v326
        %v359 = vcvt.s32.f32 %v327
        %v360 = vcvt.s32.f32 %v328
        %v361 = vcvt.s32.f32 %v329
        %v362 = vcvt.s32.f32 %v330
        %v363 = vcvt.s32.f32 %v331
        %v364 = vcvt.s32.f32 %v332
        %v365 = vcvt.s32.f32 %v333
        %v366 = vcvt.s32.f32 %v334
        %v367 = vcvt.s32.f32 %v335
        %v368 = vcvt.s32.f32 %v336
        %v369 = vcvt.s32.f32 %v337
        %v370 = vcvt.s32.f32 %v338
        %v371 = vld [vmem:[#allocation6] sm:$0xff]
        %v372 = vld [vmem:[#allocation6 + $0x8] sm:$0xff]
        %373 = vmatpush.msra.mxu0 %v354
        %374 = vmatpush.msra.mxu0 %v353
        %375 = vmatpush.msra.mxu0 %v352
        %376 = vmatpush.msra.mxu0 %v351
        %377 = vmatpush.msra.mxu0 %v350
        %378 = vmatpush.msra.mxu0 %v349
        %379 = vmatpush.msra.mxu0 %v348
        %380 = vmatpush.msra.mxu0 %v347
        %381 = vmatpush.msra.mxu0 %v346
        %382 = vmatpush.msra.mxu0 %v345
        %383 = vmatpush.msra.mxu0 %v344
        %384 = vmatpush.msra.mxu0 %v343
        %385 = vmatpush.msra.mxu0 %v342
        %386 = vmatpush.msra.mxu0 %v341
        %387 = vmatpush.msra.mxu0 %v340
        %388 = vmatpush.msra.mxu0 %v339
        %389 = vmatmul.f32.gmra.mxu0 %v371
        %v390 = vpop.f32.mrf.mxu0
        %v391 = vadd.f32 0.0, %v390
        %392 = vdwg.mxu0
        %393 = vmatpush.msra.mxu0 %v370
        %394 = vmatpush.msra.mxu0 %v369
        %395 = vmatpush.msra.mxu0 %v368
        %396 = vmatpush.msra.mxu0 %v367
        %397 = vmatpush.msra.mxu0 %v366
        %398 = vmatpush.msra.mxu0 %v365
        %399 = vmatpush.msra.mxu0 %v364
        %400 = vmatpush.msra.mxu0 %v363
        %401 = vmatpush.msra.mxu0 %v362
        %402 = vmatpush.msra.mxu0 %v361
        %403 = vmatpush.msra.mxu0 %v360
        %404 = vmatpush.msra.mxu0 %v359
        %405 = vmatpush.msra.mxu0 %v358
        %406 = vmatpush.msra.mxu0 %v357
        %407 = vmatpush.msra.mxu0 %v356
        %408 = vmatpush.msra.mxu0 %v355
        %409 = vmatmul.f32.gmra.mxu0 %v372
        %v410 = vpop.f32.mrf.mxu0
        %v411 = vadd.f32 %v391, %v410
        %412 = vdwg.mxu0
        %p413 = scmp.eq.s32.totalorder %s27, 0
        // Predicated region
        $region37: #{tpu_custom_call.1} parent=27 // pred_check
          %p414 = pneg %p413
        $region38: #{tpu_custom_call.1} parent=27 // pred_check_branch
          %416 = sbr.rel (%p414) target = $region40
        $region39: #{tpu_custom_call.1} parent=27 // pred_region
          %417 = vst [vmem:[#allocation2] sm:$0xff] %v411
        $region40: #{tpu_custom_call.1} parent=27 // pred_fallthru
          _
        %p418 = scmp.ne.s32.totalorder %s27, 0
        // Predicated region
        $region41: #{tpu_custom_call.1} parent=27 // pred_check
          %p419 = pneg %p418
        $region42: #{tpu_custom_call.1} parent=27 // pred_check_branch
          %421 = sbr.rel (%p419) target = $region44
        $region43: #{tpu_custom_call.1} parent=27 // pred_region
          %v422 = vld [vmem:[#allocation2] sm:$0xff]
          %v423 = vadd.f32 %v422, %v411
          %424 = vst [vmem:[#allocation2] sm:$0xff] %v423
        $region44: #{tpu_custom_call.1} parent=27 // pred_fallthru
          _
        // Predicated region
        $region45: #{tpu_custom_call.1} parent=27 // pred_check
          %p425 = pneg %p413
        $region46: #{tpu_custom_call.1} parent=27 // pred_check_branch
          %427 = sbr.rel (%p425) target = $region48
        $region47: #{tpu_custom_call.1} parent=27 // pred_region
          %v428 = vld [vmem:[#allocation2] sm:$0xff]
          %429 = vst [vmem:[%s204] sm:$0xff] %v428
        $region48: #{tpu_custom_call.1} parent=27 // pred_fallthru
          _
        %s430 = sand.u32 %s103, 1
        %s431 = scalar_lea.sflag [#allocation5], %s430
        %s432 = sand.u32 %s103, 1
        %s433 = smul.addr %s432, 8
        %s434 = scalar_lea.vmem [#allocation8], %s433
        // Predicated region
        $region49: #{tpu_custom_call.1} parent=27 // pred_check
          %p435 = pneg %p113
        $region50: #{tpu_custom_call.1} parent=27 // pred_check_branch
          %437 = sbr.rel (%p435) target = $region52
        $region51: #{tpu_custom_call.1} parent=27 // pred_region
          %439 = vsyncadd %s431, 0
          %s440 = smul.addr %s25, 2
          %s441 = sadd.s32 %s26, %s440
          %s442 = smul.addr %s441, 8
          %s443 = scalar_lea.hbm %s2, %s442
          %s445 = sshll.u32 %s434, 4
          %s446 = int_to_ptr.vmem [resolvable:$true] %s445
          %s447 = sshll.u32 %s443, 4
          %s448 = int_to_ptr.hbm [resolvable:$true] %s447
          %450 = dma.vmem_to_hbm [thread:$0]  %s446, 128, %s448, %s431
        $region52: #{tpu_custom_call.1} parent=27 // pred_fallthru
          _
      $region28: #{tpu_custom_call.1} parent=5 // pred_fallthru
        _
      %p451 = scmp.le.s32.totalorder 2, %s15
      // Predicated region
      $region53: #{tpu_custom_call.1} parent=5 // pred_check
        %p452 = pneg %p451
      $region54: #{tpu_custom_call.1} parent=5 // pred_check_branch
        %454 = sbr.rel (%p452) target = $region56
      $region55: #{tpu_custom_call.1} parent=5 // pred_region
        %s455 = ssub.s32 %s15, 2
        // Predicated region
        $region57: #{tpu_custom_call.1} parent=55 // pred_check
          %p456 = pneg %p119
        $region58: #{tpu_custom_call.1} parent=55 // pred_check_branch
          %458 = sbr.rel (%p456) target = $region60
        $region59: #{tpu_custom_call.1} parent=55 // pred_region
          %s459 = sand.u32 %s104, 1
          %s460 = scalar_lea.sflag [#allocation5], %s459
          %s461 = sand.u32 %s104, 1
          %s462 = smul.addr %s461, 8
          %s463 = scalar_lea.vmem [#allocation8], %s462
          %465 = dma.done %s460, 128
        $region60: #{tpu_custom_call.1} parent=55 // pred_fallthru
          _
      $region56: #{tpu_custom_call.1} parent=5 // pred_fallthru
        _
    $region6: #{tpu_custom_call.1} parent=1 // loop_footer
      %s19 = sadd.s32 1, %s15
    $region7: #{tpu_custom_call.1} parent=1 // loop_footer_branch
      %14 = sbr.rel target = $region3
    $region8: #{tpu_custom_call.1} parent=1 // loop_exit
      _
    %466 = vsyncpa [#allocation4], 1
    %s467 = scalar_lea.sflag [#allocation4], 1
    %468 = vsyncpa %s467, 1
    %469 = vsyncpa [#allocation7], 1
    %470 = vsyncpa [#allocation5], 1
    %s471 = scalar_lea.sflag [#allocation5], 1
    %472 = vsyncpa %s471, 1

</llo_original>
